<compile_context>
chip_gen: v7x
topology: tpu7x:2x2x1
jax: 0.10.0
libtpu: 0.0.40
codegen_flags: <defaults>
</compile_context>

<pallas_src>
import functools

import jax
import jax.numpy as jnp
from jax.experimental import pallas as pl
from jax.experimental.pallas import tpu as pltpu


def _round_up(x: int, m: int) -> int:
    return (x + m - 1) // m * m


def _sat_fused_kernel(adj_ref, xw1_ref, w2_ref, o_ref, h_ref, *, tile_n: int):
    # adj_ref: (tile_n, N_pad) bf16 row-tile of Â
    # xw1_ref: (N_pad, hid_pad) bf16 precomputed X @ W1 (resident)
    # w2_ref:  (hid_pad, out_pad) bf16 (resident)
    # o_ref:   (tile_n, out_pad) f32 output row-tile
    # h_ref:   (N_pad, hid_pad) bf16 VMEM scratch holding relu(Â @ XW1)
    phase = pl.program_id(0)
    i = pl.program_id(1)

    @pl.when(phase == 0)
    def _():
        # Layer 1: H[tile] = relu(Â[tile,:] @ (X @ W1)); K = N_pad contraction.
        h = jnp.dot(adj_ref[...], xw1_ref[...],
                    preferred_element_type=jnp.float32)
        start = pl.multiple_of(i * tile_n, tile_n)
        h_ref[pl.ds(start, tile_n), :] = jnp.maximum(h, 0.0).astype(h_ref.dtype)

    @pl.when(phase == 1)
    def _():
        # Layer 2: OUT[tile] = (Â[tile,:] @ H) @ W2
        ah = jnp.dot(adj_ref[...], h_ref[...],
                     preferred_element_type=jnp.float32)
        o_ref[...] = jnp.dot(ah.astype(jnp.bfloat16), w2_ref[...],
                             preferred_element_type=jnp.float32
                             ).astype(o_ref.dtype)


def sat_fused(adj, x, w1, w2, *, lane: int = 128, max_tile: int = 128):
    """Fused SAT forward: Â @ relu(Â @ (x@W1)) @ W2 in one pallas_call."""
    n = adj.shape[0]
    hid = w1.shape[1]
    out_ch = w2.shape[1]

    tile_n = min(max_tile, _round_up(n, 8))
    n_pad = _round_up(n, tile_n)
    hid_pad = _round_up(hid, lane)
    out_pad = _round_up(out_ch, lane)
    n_tiles = n_pad // tile_n

    # Hoisted small matmul (glue): X @ W1 once, instead of per adjacency tile.
    xw1 = x.astype(jnp.float32) @ w1.astype(jnp.float32)

    # Zero-pad to TPU-friendly shapes (exact: padded rows/cols contribute 0).
    adj_p = jnp.zeros((n_pad, n_pad), jnp.float32).at[:n, :n].set(adj)
    xw1_p = jnp.zeros((n_pad, hid_pad), jnp.float32).at[:n, :hid].set(xw1)
    w2_p = jnp.zeros((hid_pad, out_pad), jnp.float32).at[:hid, :out_ch].set(w2)

    # bf16 MXU inputs, f32 accumulation inside the kernel.
    adj_b = adj_p.astype(jnp.bfloat16)
    xw1_b = xw1_p.astype(jnp.bfloat16)
    w2_b = w2_p.astype(jnp.bfloat16)

    # Rough VMEM footprint (double-buffered inputs/outputs + scratch).
    vmem_needed = (2 * tile_n * n_pad * 2        # adj row tiles (bf16)
                   + 2 * n_pad * hid_pad * 2     # resident XW1
                   + 2 * hid_pad * out_pad * 2   # resident W2
                   + 2 * tile_n * out_pad * 4    # output tiles (f32)
                   + n_pad * hid_pad * 2)        # H scratch (bf16)
    vmem_limit = int(min(max(vmem_needed + (4 << 20), 16 << 20), 96 << 20))

    kernel = functools.partial(_sat_fused_kernel, tile_n=tile_n)

    out_p = pl.pallas_call(
        kernel,
        out_shape=jax.ShapeDtypeStruct((n_pad, out_pad), jnp.float32),
        grid=(2, n_tiles),
        in_specs=[
            pl.BlockSpec((tile_n, n_pad), lambda p, i: (i, 0)),    # Â row tile
            pl.BlockSpec((n_pad, hid_pad), lambda p, i: (0, 0)),   # XW1 (resident)
            pl.BlockSpec((hid_pad, out_pad), lambda p, i: (0, 0)),  # W2 (resident)
        ],
        # During phase 0 (p == 0) keep the output block index pinned at 0 so no
        # unwritten buffers get flushed; phase 1 walks the real row tiles.
        out_specs=pl.BlockSpec((tile_n, out_pad), lambda p, i: (i * p, 0)),
        scratch_shapes=[pltpu.VMEM((n_pad, hid_pad), jnp.bfloat16)],
        compiler_params=pltpu.CompilerParams(
            # Phase 1 depends on all phase-0 tiles via the VMEM scratch, so the
            # whole grid must run sequentially on a single core.
            dimension_semantics=("arbitrary", "arbitrary"),
            vmem_limit_bytes=vmem_limit,
        ),
    )(adj_b, xw1_b, w2_b)

    return out_p[:n, :out_ch]


def gcn_norm_dense(edge_index, edge_weight, num_nodes):
    """Plain-JAX glue: dense GCN-normalized adjacency with self loops.

    Â[i, j] = d_i^{-1/2} * w_{j->i} * d_j^{-1/2},  A + I, d = weighted degree.
    """
    src = edge_index[0]
    dst = edge_index[1]
    if edge_weight is None:
        edge_weight = jnp.ones(src.shape[0], dtype=jnp.float32)
    loop = jnp.arange(num_nodes, dtype=src.dtype)
    src = jnp.concatenate([src, loop])
    dst = jnp.concatenate([dst, loop])
    ew = jnp.concatenate(
        [edge_weight.astype(jnp.float32), jnp.ones(num_nodes, jnp.float32)])
    # propagation out[i] = sum_{j->i} w * x[j]  =>  A[dst, src] = w
    adj = jnp.zeros((num_nodes, num_nodes), jnp.float32).at[dst, src].add(ew)
    deg = adj.sum(axis=1)
    dinv = jnp.where(deg > 0, deg ** -0.5, 0.0)
    return dinv[:, None] * adj * dinv[None, :]


def glorot(key, fan_in, fan_out):
    limit = (6.0 / (fan_in + fan_out)) ** 0.5
    return jax.random.uniform(
        key, (fan_in, fan_out), jnp.float32, minval=-limit, maxval=limit)


def sat_forward(x, edge_index, edge_weight, params, num_nodes):
    """SAT.forward: SATConv -> ReLU -> Dropout(identity, eval) -> SATConv."""
    adj = gcn_norm_dense(edge_index, edge_weight, num_nodes)  # normalize=True
    w1, w2 = params
    # dropout(0.5) is identity at inference time
    return sat_fused(adj, x, w1, w2)


if __name__ == "__main__":
    key = jax.random.PRNGKey(0)
    k_x, k_e, k_w1, k_w2 = jax.random.split(key, 4)

    num_nodes = 32
    in_channels = 16
    hid = 16              # hids=[16]
    out_channels = 4
    num_edges = 64

    # deterministic synthetic graph + features
    x = jax.random.normal(k_x, (num_nodes, in_channels), jnp.float32)
    edge_index = jax.random.randint(
        k_e, (2, num_edges), 0, num_nodes, dtype=jnp.int32)
    edge_weight = None    # defaults to ones

    # deterministic glorot-initialized weights (bias=False, bn=False)
    params = (glorot(k_w1, in_channels, hid), glorot(k_w2, hid, out_channels))

    out = sat_forward(x, edge_index, edge_weight, params, num_nodes)
    jax.block_until_ready(out)
    assert out.shape == (num_nodes, out_channels)

    adj_ref = gcn_norm_dense(edge_index, edge_weight, num_nodes)

    # (1) Reference that mirrors the kernel's bf16-input / f32-accumulate path.
    adj_b = adj_ref.astype(jnp.bfloat16)
    xw1_b = (x @ params[0]).astype(jnp.bfloat16)
    w2_b = params[1].astype(jnp.bfloat16)
    h_b = jnp.maximum(
        jnp.dot(adj_b, xw1_b, preferred_element_type=jnp.float32), 0.0
    ).astype(jnp.bfloat16)
    ah_b = jnp.dot(adj_b, h_b,
                   preferred_element_type=jnp.float32).astype(jnp.bfloat16)
    out_mirror = jnp.dot(ah_b, w2_b, preferred_element_type=jnp.float32)
    assert jnp.allclose(out, out_mirror, atol=1e-2, rtol=1e-2)

    # (2) Full-f32 semantic reference (loose tolerance due to bf16 MXU inputs).
    h32 = jnp.maximum(adj_ref @ (x @ params[0]), 0.0)
    out32 = adj_ref @ (h32 @ params[1])
    assert jnp.allclose(out, out32, atol=1e-1, rtol=1e-1)

    print("KERNEL_OK")
</pallas_src>

<mosaic_0001>
module attributes {stable_mosaic.version = 11 : i64} {
  func.func @_sat_fused_kernel(%arg0: i32, %arg1: i32, %arg2: memref<32x32xbf16, #tpu.memory_space<vmem>>, %arg3: memref<32x128xbf16, #tpu.memory_space<vmem>>, %arg4: memref<128x128xbf16, #tpu.memory_space<vmem>>, %arg5: memref<32x128xf32, #tpu.memory_space<vmem>>, %arg6: memref<32x128xbf16, #tpu.memory_space<vmem>>) attributes {dimension_semantics = [#tpu.dimension_semantics<arbitrary>, #tpu.dimension_semantics<arbitrary>], iteration_bounds = array<i64: 2, 1>, scalar_prefetch = 0 : i64, scratch_operands = 1 : i64, tpu.core_type = #tpu.core_type<tc>, window_params = [{transform_indices = @transform_0, window_bounds = array<i64: 32, 32>}, {pipeline_mode = #tpu.pipeline_mode<synchronous>, transform_indices = @transform_1, window_bounds = array<i64: 32, 128>}, {pipeline_mode = #tpu.pipeline_mode<synchronous>, transform_indices = @transform_2, window_bounds = array<i64: 128, 128>}, {transform_indices = @transform_3, window_bounds = array<i64: 32, 128>}]} {
    %c0_i32 = arith.constant 0 : i32
    %0 = arith.cmpi eq, %arg0, %c0_i32 : i32
    %1 = arith.extui %0 : i1 to i32
    %c0_i32_0 = arith.constant 0 : i32
    %2 = arith.cmpi ne, %1, %c0_i32_0 : i32
    scf.if %2 {
      %c0 = arith.constant 0 : index
      %c0_2 = arith.constant 0 : index
      %6 = vector.load %arg2[%c0, %c0_2] : memref<32x32xbf16, #tpu.memory_space<vmem>>, vector<32x32xbf16>
      %c0_3 = arith.constant 0 : index
      %c0_4 = arith.constant 0 : index
      %7 = vector.load %arg3[%c0_3, %c0_4] : memref<32x128xbf16, #tpu.memory_space<vmem>>, vector<32x128xbf16>
      %cst = arith.constant dense<0.000000e+00> : vector<32x128xf32>
      %8 = tpu.matmul %6, %7, %cst {dimension_numbers = #tpu.dot_dimension_numbers<[1], [0], [0], [1], [0, 0, 1, 1], [], []>} : vector<32x32xbf16>, vector<32x128xbf16>, vector<32x128xf32> -> vector<32x128xf32>
      %c32_i32 = arith.constant 32 : i32
      %9 = arith.muli %arg1, %c32_i32 : i32
      %10 = tpu.assume_multiple %9, 32 : i32
      %cst_5 = arith.constant 0.000000e+00 : f32
      %11 = vector.broadcast %cst_5 : f32 to vector<32x128xf32>
      %12 = arith.maximumf %8, %11 : vector<32x128xf32>
      %13 = arith.truncf %12 : vector<32x128xf32> to vector<32x128xbf16>
      %14 = arith.index_cast %10 : i32 to index
      %c0_6 = arith.constant 0 : index
      %15 = vector.load %arg6[%14, %c0_6] : memref<32x128xbf16, #tpu.memory_space<vmem>>, vector<32x128xbf16>
      tpu.vector_store %arg6[%14, %c0_6], %13 {strides = array<i32>} : memref<32x128xbf16, #tpu.memory_space<vmem>>, vector<32x128xbf16>,
    } else {
    }
    %c1_i32 = arith.constant 1 : i32
    %3 = arith.cmpi eq, %arg0, %c1_i32 : i32
    %4 = arith.extui %3 : i1 to i32
    %c0_i32_1 = arith.constant 0 : i32
    %5 = arith.cmpi ne, %4, %c0_i32_1 : i32
    scf.if %5 {
      %c0 = arith.constant 0 : index
      %c0_2 = arith.constant 0 : index
      %6 = vector.load %arg2[%c0, %c0_2] : memref<32x32xbf16, #tpu.memory_space<vmem>>, vector<32x32xbf16>
      %c0_3 = arith.constant 0 : index
      %c0_4 = arith.constant 0 : index
      %7 = vector.load %arg6[%c0_3, %c0_4] : memref<32x128xbf16, #tpu.memory_space<vmem>>, vector<32x128xbf16>
      %cst = arith.constant dense<0.000000e+00> : vector<32x128xf32>
      %8 = tpu.matmul %6, %7, %cst {dimension_numbers = #tpu.dot_dimension_numbers<[1], [0], [0], [1], [0, 0, 1, 1], [], []>} : vector<32x32xbf16>, vector<32x128xbf16>, vector<32x128xf32> -> vector<32x128xf32>
      %9 = arith.truncf %8 : vector<32x128xf32> to vector<32x128xbf16>
      %c0_5 = arith.constant 0 : index
      %c0_6 = arith.constant 0 : index
      %10 = vector.load %arg4[%c0_5, %c0_6] : memref<128x128xbf16, #tpu.memory_space<vmem>>, vector<128x128xbf16>
      %cst_7 = arith.constant dense<0.000000e+00> : vector<32x128xf32>
      %11 = tpu.matmul %9, %10, %cst_7 {dimension_numbers = #tpu.dot_dimension_numbers<[1], [0], [0], [1], [0, 0, 1, 1], [], []>} : vector<32x128xbf16>, vector<128x128xbf16>, vector<32x128xf32> -> vector<32x128xf32>
      %c0_8 = arith.constant 0 : index
      %c0_9 = arith.constant 0 : index
      %12 = vector.load %arg5[%c0_8, %c0_9] : memref<32x128xf32, #tpu.memory_space<vmem>>, vector<32x128xf32>
      tpu.vector_store %arg5[%c0_8, %c0_9], %11 {strides = array<i32>} : memref<32x128xf32, #tpu.memory_space<vmem>>, vector<32x128xf32>,
    } else {
    }
    return
  }
  func.func @transform_0(%arg0: i32, %arg1: i32) -> (i32, i32) {
    %c0_i32 = arith.constant 0 : i32
    %c0_i32_0 = arith.constant 0 : i32
    return %arg1, %c0_i32 : i32, i32
  }
  func.func @transform_1(%arg0: i32, %arg1: i32) -> (i32, i32) {
    %c0_i32 = arith.constant 0 : i32
    %c0_i32_0 = arith.constant 0 : i32
    %c0_i32_1 = arith.constant 0 : i32
    return %c0_i32, %c0_i32_0 : i32, i32
  }
  func.func @transform_2(%arg0: i32, %arg1: i32) -> (i32, i32) {
    %c0_i32 = arith.constant 0 : i32
    %c0_i32_0 = arith.constant 0 : i32
    %c0_i32_1 = arith.constant 0 : i32
    return %c0_i32, %c0_i32_0 : i32, i32
  }
  func.func @transform_3(%arg0: i32, %arg1: i32) -> (i32, i32) {
    %0 = arith.muli %arg1, %arg0 : i32
    %c0_i32 = arith.constant 0 : i32
    %c0_i32_0 = arith.constant 0 : i32
    return %0, %c0_i32 : i32, i32
  }
}

</mosaic_0001>

<llo_original>
// kernel: tpu_custom_call.1
$region0: #{tpu_custom_call.1}
  #allocation0 [shape = 'u32[]', space=smem, size = 0x4, offset = 0x4, fixed_abs, tag = 'smem constant byte address 0x4 - core index']
  #allocation1 [shape = 'u32[144,128]{1,0:T(1,128)}', space=vmem, size = 0x12000, scoped, tag = 'internal scratch']
  #allocation2 [shape = 'bf16[32,128]{1,0:T(16,128)(2,1)}', space=vmem, size = 0x2000, scoped, tag = 'scratch operand']
  %s0 = inlined_call_operand.hbm [shape: bf16[32,32], index: 0, kind: input, shape index: {}]
  %s1 = inlined_call_operand.hbm [shape: bf16[32,128], index: 1, kind: input, shape index: {}]
  %s2 = inlined_call_operand.hbm [shape: bf16[128,128], index: 2, kind: input, shape index: {}]
  %s3 = inlined_call_operand.hbm [shape: f32[32,128], index: 3, kind: output, shape index: {}]
  %s4 = sld [smem:[#allocation0]]
  $region65: #{tpu_custom_call.1} parent=0
    _
  %s6 = ssub.s32 1, %s4
  %s7 = scalar_select 0, %s6, %s4
  $region1: #{tpu_custom_call.1} parent=0
    #allocation3 [shape = 'u8[8192]{0}', space=vmem, size = 0x2000, scoped, tag = 'input window, operand 0, single buffered']
    #allocation4 [shape = 's32[2]{0}', space=sflag, size = 0x8, scoped, tag = 'scoped memory for tpu_custom_call.1']
    #allocation5 [shape = 's32[2]{0}', space=sflag, size = 0x8, scoped, tag = 'scoped memory for tpu_custom_call.1']
    #allocation6 [shape = 'u8[8192]{0}', space=vmem, size = 0x2000, scoped, tag = 'input window, operand 1, single buffered']
    #allocation7 [shape = 's32[1]{0}', space=sflag, size = 0x4, scoped, tag = 'scoped memory for tpu_custom_call.1']
    #allocation8 [shape = 'u8[32768]{0}', space=vmem, size = 0x8000, scoped, tag = 'input window, operand 2, single buffered']
    #allocation9 [shape = 'u8[32768]{0}', space=vmem, size = 0x8000, scoped, tag = 'output window, operand 0']
    %8 = vsyncpa [#allocation4], 0
    %9 = vsyncpa [#allocation7], 0
    %10 = vsyncpa [#allocation5], 0
    %s11 = scalar_lea.sflag [#allocation5], 1
    %12 = vsyncpa %s11, 0
    loop: start=0, step=1, limit=4
    $region2: #{tpu_custom_call.1} parent=1 // loop_pre_header
      _
    $region3: #{tpu_custom_call.1} parent=1 // loop_header
      %s14 = sphi 0, %s18
      %p15 = scmp.ge.s32.totalorder %s14, 4
      %s21 = sphi 0, %s33
      %s22 = sphi 0, %s29
      %s23 = sphi 0, %s21
      %s24 = sphi 0, %s22
      %s25 = sphi 0, %s23
      %s26 = sphi 0, %s24
      %s36 = sphi 0, %s38
      %s39 = sphi 0, %s36
      %s40 = sphi 0, %s39
      %s56 = sphi 0, %s40
      %s60 = sphi 0, %s60
      %s62 = sphi 0, %s60
      %s63 = sphi 0, %s62
      %s77 = sphi 0, %s63
      %s81 = sphi 0, %s81
      %s83 = sphi 0, %s81
      %s84 = sphi 0, %s83
      %s98 = sphi 0, %s84
      %s106 = sphi 0, %s108
      %s109 = sphi 0, %s106
      %s110 = sphi 0, %s109
      %s126 = sphi 0, %s110
    $region4: #{tpu_custom_call.1} parent=1 // loop_header_branch
      %17 = sbr.rel (%p15) target = $region8
    $region5: #{tpu_custom_call.1} parent=1 // loop_body
      %s19 = ssub.s32 %s14, 1
      %s20 = ssub.s32 %s14, 2
      %s27 = sadd.s32 1, %s22
      %p28 = scmp.ge.s32.totalorder %s27, 1
      %s29 = scalar_select %p28, 0, %s27
      %s30 = sadd.s32 1, %s21
      %s31 = scalar_select %p28, %s30, %s21
      %p32 = scmp.ge.s32.totalorder %s31, 2
      %s33 = scalar_select %p32, 0, %s31
      %s34 = ssub.s32 %s22, %s29
      %p35 = scmp.eq.s32.totalorder %s34, 0
      %s37 = sadd.s32 %s36, 1
      %s38 = scalar_select %p35, %s36, %s37
      %p41 = pneg %p35
      %p42 = scmp.eq.s32.totalorder %s14, 1
      %p43 = por %p41, %p42
      %p44 = scmp.ne.s32.totalorder %s36, %s39
      %p45 = scmp.eq.s32.totalorder %s14, 0
      %p46 = por %p44, %p45
      %p47 = scmp.ne.s32.totalorder %s36, %s39
      %p48 = scmp.eq.s32.totalorder %s19, 1
      %p49 = por %p47, %p48
      %p50 = scmp.ne.s32.totalorder %s39, %s40
      %p51 = scmp.eq.s32.totalorder %s19, 0
      %p52 = por %p50, %p51
      %p53 = scmp.ne.s32.totalorder %s39, %s40
      %p54 = scmp.eq.s32.totalorder %s20, 1
      %p55 = por %p53, %p54
      %p57 = scmp.ne.s32.totalorder %s40, %s56
      %p58 = scmp.eq.s32.totalorder %s20, 0
      %p59 = por %p57, %p58
      %s61 = sadd.s32 %s60, 1
      %p64 = scmp.eq.s32.totalorder %s14, 1
      %p65 = scmp.ne.s32.totalorder %s60, %s62
      %p66 = scmp.eq.s32.totalorder %s14, 0
      %p67 = por %p65, %p66
      %p68 = scmp.ne.s32.totalorder %s60, %s62
      %p69 = scmp.eq.s32.totalorder %s19, 1
      %p70 = por %p68, %p69
      %p71 = scmp.ne.s32.totalorder %s62, %s63
      %p72 = scmp.eq.s32.totalorder %s19, 0
      %p73 = por %p71, %p72
      %p74 = scmp.ne.s32.totalorder %s62, %s63
      %p75 = scmp.eq.s32.totalorder %s20, 1
      %p76 = por %p74, %p75
      %p78 = scmp.ne.s32.totalorder %s63, %s77
      %p79 = scmp.eq.s32.totalorder %s20, 0
      %p80 = por %p78, %p79
      %s82 = sadd.s32 %s81, 1
      %p85 = scmp.eq.s32.totalorder %s14, 1
      %p86 = scmp.ne.s32.totalorder %s81, %s83
      %p87 = scmp.eq.s32.totalorder %s14, 0
      %p88 = por %p86, %p87
      %p89 = scmp.ne.s32.totalorder %s81, %s83
      %p90 = scmp.eq.s32.totalorder %s19, 1
      %p91 = por %p89, %p90
      %p92 = scmp.ne.s32.totalorder %s83, %s84
      %p93 = scmp.eq.s32.totalorder %s19, 0
      %p94 = por %p92, %p93
      %p95 = scmp.ne.s32.totalorder %s83, %s84
      %p96 = scmp.eq.s32.totalorder %s20, 1
      %p97 = por %p95, %p96
      %p99 = scmp.ne.s32.totalorder %s84, %s98
      %p100 = scmp.eq.s32.totalorder %s20, 0
      %p101 = por %p99, %p100
      %s102 = smul.u32 %s22, %s21
      %s103 = smul.u32 %s29, %s33
      %s104 = ssub.s32 %s102, %s103
      %p105 = scmp.eq.s32.totalorder %s104, 0
      %s107 = sadd.s32 %s106, 1
      %s108 = scalar_select %p105, %s106, %s107
      %p111 = pneg %p105
      %p112 = scmp.eq.s32.totalorder %s14, 1
      %p113 = por %p111, %p112
      %p114 = scmp.ne.s32.totalorder %s106, %s109
      %p115 = scmp.eq.s32.totalorder %s14, 0
      %p116 = por %p114, %p115
      %p117 = scmp.ne.s32.totalorder %s106, %s109
      %p118 = scmp.eq.s32.totalorder %s19, 1
      %p119 = por %p117, %p118
      %p120 = scmp.ne.s32.totalorder %s109, %s110
      %p121 = scmp.eq.s32.totalorder %s19, 0
      %p122 = por %p120, %p121
      %p123 = scmp.ne.s32.totalorder %s109, %s110
      %p124 = scmp.eq.s32.totalorder %s20, 1
      %p125 = por %p123, %p124
      %p127 = scmp.ne.s32.totalorder %s110, %s126
      %p128 = scmp.eq.s32.totalorder %s20, 0
      %p129 = por %p127, %p128
      %p130 = scmp.le.s32.totalorder 1, %s14
      %p131 = scmp.lt.s32.totalorder %s14, 3
      %p132 = pnand %p130, %p131
      %p133 = pneg %p132
      // Predicated region
      $region9: #{tpu_custom_call.1} parent=5 // pred_check
        _
      $region10: #{tpu_custom_call.1} parent=5 // pred_check_branch
        %135 = sbr.rel (%p132) target = $region12
      $region11: #{tpu_custom_call.1} parent=5 // pred_region
        %s136 = ssub.s32 %s14, 1
        // Predicated region
        $region13: #{tpu_custom_call.1} parent=11 // pred_check
          %p137 = pneg %p52
        $region14: #{tpu_custom_call.1} parent=11 // pred_check_branch
          %139 = sbr.rel (%p137) target = $region16
        $region15: #{tpu_custom_call.1} parent=11 // pred_region
          %s140 = smul.u32 4, %s24
          %s142 = ssub.s32 256, 256
          %143 = vsyncadd [#allocation4], %s142
          %s144 = smul.addr %s140, 64
          %s145 = scalar_lea.hbm %s0, %s144
          %s146 = sshll.u32 [#allocation3], 4
          %s147 = int_to_ptr.vmem [resolvable:$true] %s146
          %152 = dma.hbm_to_vmem [thread:$0]  %s145, 256, %s147, [#allocation4], 64, 64, 4
        $region16: #{tpu_custom_call.1} parent=11 // pred_fallthru
          _
        // Predicated region
        $region17: #{tpu_custom_call.1} parent=11 // pred_check
          %p153 = pneg %p73
        $region18: #{tpu_custom_call.1} parent=11 // pred_check_branch
          %155 = sbr.rel (%p153) target = $region20
        $region19: #{tpu_custom_call.1} parent=11 // pred_region
          %s157 = ssub.s32 256, 256
          %158 = vsyncadd [#allocation7], %s157
          %s159 = sshll.u32 [#allocation6], 4
          %s160 = int_to_ptr.vmem [resolvable:$true] %s159
          %165 = dma.hbm_to_vmem [thread:$0]  %s1, 256, %s160, [#allocation7], 64, 64, 4
        $region20: #{tpu_custom_call.1} parent=11 // pred_fallthru
          _
        // Predicated region
        $region21: #{tpu_custom_call.1} parent=11 // pred_check
          %p166 = pneg %p94
        $region22: #{tpu_custom_call.1} parent=11 // pred_check_branch
          %168 = sbr.rel (%p166) target = $region24
        $region23: #{tpu_custom_call.1} parent=11 // pred_region
          %s170 = ssub.s32 1024, 1024
          %171 = vsyncadd [#allocation7], %s170
          %s172 = sshll.u32 [#allocation8], 4
          %s173 = int_to_ptr.vmem [resolvable:$true] %s172
          %178 = dma.hbm_to_vmem [thread:$0]  %s2, 1024, %s173, [#allocation7], 64, 64, 4
        $region24: #{tpu_custom_call.1} parent=11 // pred_fallthru
          _
      $region12: #{tpu_custom_call.1} parent=5 // pred_fallthru
        _
      %p179 = scmp.lt.s32.totalorder %s14, 2
      // Predicated region
      $region25: #{tpu_custom_call.1} parent=5 // pred_check
        %p180 = pneg %p179
      $region26: #{tpu_custom_call.1} parent=5 // pred_check_branch
        %182 = sbr.rel (%p180) target = $region28
      $region27: #{tpu_custom_call.1} parent=5 // pred_region
        _
      $region28: #{tpu_custom_call.1} parent=5 // pred_fallthru
        _
      %p183 = scmp.le.s32.totalorder 1, %s14
      %p184 = scmp.lt.s32.totalorder %s14, 3
      %p185 = pnand %p183, %p184
      %p186 = pneg %p185
      // Predicated region
      $region29: #{tpu_custom_call.1} parent=5 // pred_check
        _
      $region30: #{tpu_custom_call.1} parent=5 // pred_check_branch
        %188 = sbr.rel (%p185) target = $region32
      $region31: #{tpu_custom_call.1} parent=5 // pred_region
        %s189 = ssub.s32 %s14, 1
        // Predicated region
        $region33: #{tpu_custom_call.1} parent=31 // pred_check
          %p190 = pneg %p52
        $region34: #{tpu_custom_call.1} parent=31 // pred_check_branch
          %192 = sbr.rel (%p190) target = $region36
        $region35: #{tpu_custom_call.1} parent=31 // pred_region
          %193 = dma.done [#allocation4], 256
        $region36: #{tpu_custom_call.1} parent=31 // pred_fallthru
          _
        // Predicated region
        $region37: #{tpu_custom_call.1} parent=31 // pred_check
          %p194 = pneg %p73
        $region38: #{tpu_custom_call.1} parent=31 // pred_check_branch
          %196 = sbr.rel (%p194) target = $region40
        $region39: #{tpu_custom_call.1} parent=31 // pred_region
          %197 = dma.done [#allocation7], 256
        $region40: #{tpu_custom_call.1} parent=31 // pred_fallthru
          _
        // Predicated region
        $region41: #{tpu_custom_call.1} parent=31 // pred_check
          %p198 = pneg %p94
        $region42: #{tpu_custom_call.1} parent=31 // pred_check_branch
          %200 = sbr.rel (%p198) target = $region44
        $region43: #{tpu_custom_call.1} parent=31 // pred_region
          %201 = dma.done [#allocation7], 1024
        $region44: #{tpu_custom_call.1} parent=31 // pred_fallthru
          _
        %p202 = pneg %p52
        %p203 = pneg %p49
        %p204 = pneg %p73
        %p205 = pneg %p70
        %p206 = pneg %p94
        %p207 = pneg %p91
        %p208 = pneg %p122
        %p209 = pneg %p119
        %s210 = sand.u32 %s109, 1
        %s211 = scalar_lea.sflag [#allocation5], %s210
        %s212 = sand.u32 %s109, 1
        %s213 = smul.addr %s212, 32
        %s214 = scalar_lea.vmem [#allocation9], %s213
        %s215 = smul.u32 4, %s24
        %s216 = smul.u32 %s24, %s23
        %s217 = smul.u32 4, %s216
        %p219 = scmp.eq.s32.totalorder %s23, 0
        // Predicated region
        $region45: #{tpu_custom_call.1} parent=31 // pred_check
          %p220 = pneg %p219
        $region46: #{tpu_custom_call.1} parent=31 // pred_check_branch
          %222 = sbr.rel (%p220) target = $region48
        $region47: #{tpu_custom_call.1} parent=31 // pred_region
          %v223 = vld [vmem:[#allocation3] sm:$0xf]
          %v224 = vld [vmem:[#allocation3 + $0x4] sm:$0xf]
          %v225 = vld [vmem:[#allocation3 + $0x8] sm:$0xf]
          %v226 = vld [vmem:[#allocation3 + $0xc] sm:$0xf]
          %v227 = vld [vmem:[#allocation6] sm:$0xf]
          %v228 = vld [vmem:[#allocation6 + $0x4] sm:$0xf]
          %v229 = vld [vmem:[#allocation6 + $0x8] sm:$0xf]
          %v230 = vld [vmem:[#allocation6 + $0xc] sm:$0xf]
          %v235 = vunpack.c.l.b16 %v223
          %v236 = vunpack.c.l.b16 %v224
          %v237 = vunpack.c.l.b16 %v225
          %v238 = vunpack.c.l.b16 %v226
          %v239 = vpack.c.b16 %v236, %v235
          %v240 = vpack.c.b16 %v238, %v237
          %v245 = vunpack.c.l.b16 %v227
          %v246 = vunpack.c.l.b16 %v228
          %v247 = vunpack.c.l.b16 %v229
          %v248 = vunpack.c.l.b16 %v230
          %v249 = vpack.c.b16 %v246, %v245
          %v250 = vpack.c.b16 %v248, %v247
          %vm253 = vcmask 261120
          %v255 = vsel %vm253, %v239, 0
          %v258 = vsel %vm253, %v240, 0
          %260 = vmatprep.subr.bf16.mxu0 0
          %261 = vmatpush1.bf16.msra.mxu0 %v249
          %262 = vmatprep.subr.bf16.mxu0 0
          %263 = vmatpush1.bf16.msra.mxu0 %v250
          %264 = vmatprep.subr.bf16.mxu0 0
          %265 = vmatpush1.bf16.msra.mxu0 0
          %266 = vmatprep.subr.bf16.mxu0 0
          %267 = vmatpush1.bf16.msra.mxu0 0
          %268 = vmatprep.subr.bf16.mxu0 0
          %269 = vmatpush1.bf16.msra.mxu0 0
          %270 = vmatprep.subr.bf16.mxu0 0
          %271 = vmatpush1.bf16.msra.mxu0 0
          %272 = vmatprep.subr.bf16.mxu0 0
          %273 = vmatpush1.bf16.msra.mxu0 0
          %274 = vmatprep.subr.bf16.mxu0 0
          %275 = vmatpush1.bf16.msra.mxu0 0
          %276 = vmatprep.subr.bf16.mxu0 0
          %277 = vmatpush1.bf16.msra.mxu0 0
          %278 = vmatprep.subr.bf16.mxu0 0
          %279 = vmatpush1.bf16.msra.mxu0 0
          %280 = vmatprep.subr.bf16.mxu0 0
          %281 = vmatpush1.bf16.msra.mxu0 0
          %282 = vmatprep.subr.bf16.mxu0 0
          %283 = vmatpush1.bf16.msra.mxu0 0
          %284 = vmatprep.subr.bf16.mxu0 0
          %285 = vmatpush1.bf16.msra.mxu0 0
          %286 = vmatprep.subr.bf16.mxu0 0
          %287 = vmatpush1.bf16.msra.mxu0 0
          %288 = vmatprep.subr.bf16.mxu0 0
          %289 = vmatpush1.bf16.msra.mxu0 0
          %290 = vmatprep.subr.bf16.mxu0 0
          %291 = vmatpush1.bf16.msra.mxu0 0
          %292 = vmatprep.mubr.bf16.mxu0 0
          %293 = vmatmul.mubr.bf16.gmra.mrb[0].mxu0 %v255
          %v294 = vpop.f32.mrb[0].mxu0
          %v295 = vadd.f32 0.0, %v294
          %v296 = vpop.f32.mrb[0].mxu0
          %v297 = vpop.f32.mrb[0].mxu0
          %v298 = vadd.f32 0.0, %v297
          %v299 = vpop.f32.mrb[0].mxu0
          %300 = vmatprep.mubr.bf16.mxu0 0
          %301 = vmatmul.mubr.bf16.gmra.mrb[0].mxu0 %v258
          %v302 = vpop.f32.mrb[0].mxu0
          %v303 = vadd.f32 0.0, %v302
          %v304 = vpop.f32.mrb[0].mxu0
          %v305 = vpop.f32.mrb[0].mxu0
          %v306 = vadd.f32 0.0, %v305
          %v307 = vpop.f32.mrb[0].mxu0
          %308 = vdwg.mxu0
          %s309 = smul.u32 %s24, 32
          %v310 = vmax.f32 %v295, 0.0
          %v311 = vmax.f32 %v298, 0.0
          %v312 = vmax.f32 %v303, 0.0
          %v313 = vmax.f32 %v306, 0.0
          %v314 = vpack.c.bf16 %v311, %v310
          %v315 = vpack.c.bf16 %v313, %v312
          %s316 = sshra.s32 %s309, 4
          %s317 = sand.u32 %s309, 15
          %s318 = smul.addr %s316, 8
          %s319 = scalar_lea.vmem [#allocation2], %s318
          %320 = vst [vmem:[%s319] sm:$0xff] %v314
          %321 = vst [vmem:[%s319 + $0x8] sm:$0xff] %v315
        $region48: #{tpu_custom_call.1} parent=31 // pred_fallthru
          _
        %p322 = scmp.eq.s32.totalorder %s23, 1
        // Predicated region
        $region49: #{tpu_custom_call.1} parent=31 // pred_check
          %p323 = pneg %p322
        $region50: #{tpu_custom_call.1} parent=31 // pred_check_branch
          %325 = sbr.rel (%p323) target = $region52
        $region51: #{tpu_custom_call.1} parent=31 // pred_region
          %v326 = vld [vmem:[#allocation3] sm:$0xf]
          %v327 = vld [vmem:[#allocation3 + $0x4] sm:$0xf]
          %v328 = vld [vmem:[#allocation3 + $0x8] sm:$0xf]
          %v329 = vld [vmem:[#allocation3 + $0xc] sm:$0xf]
          %v330 = vld [vmem:[#allocation2] sm:$0xff]
          %v331 = vld [vmem:[#allocation2 + $0x8] sm:$0xff]
          %v336 = vunpack.c.l.b16 %v326
          %v337 = vunpack.c.l.b16 %v327
          %v338 = vunpack.c.l.b16 %v328
          %v339 = vunpack.c.l.b16 %v329
          %v340 = vpack.c.b16 %v337, %v336
          %v341 = vpack.c.b16 %v339, %v338
          %vm342 = vcmask 261120
          %v344 = vsel %vm342, %v340, 0
          %v347 = vsel %vm342, %v341, 0
          %349 = vmatprep.subr.bf16.mxu0 0
          %350 = vmatpush1.bf16.msra.mxu0 %v330
          %351 = vmatprep.subr.bf16.mxu0 0
          %352 = vmatpush1.bf16.msra.mxu0 %v331
          %353 = vmatprep.subr.bf16.mxu0 0
          %354 = vmatpush1.bf16.msra.mxu0 0
          %355 = vmatprep.subr.bf16.mxu0 0
          %356 = vmatpush1.bf16.msra.mxu0 0
          %357 = vmatprep.subr.bf16.mxu0 0
          %358 = vmatpush1.bf16.msra.mxu0 0
          %359 = vmatprep.subr.bf16.mxu0 0
          %360 = vmatpush1.bf16.msra.mxu0 0
          %361 = vmatprep.subr.bf16.mxu0 0
          %362 = vmatpush1.bf16.msra.mxu0 0
          %363 = vmatprep.subr.bf16.mxu0 0
          %364 = vmatpush1.bf16.msra.mxu0 0
          %365 = vmatprep.subr.bf16.mxu0 0
          %366 = vmatpush1.bf16.msra.mxu0 0
          %367 = vmatprep.subr.bf16.mxu0 0
          %368 = vmatpush1.bf16.msra.mxu0 0
          %369 = vmatprep.subr.bf16.mxu0 0
          %370 = vmatpush1.bf16.msra.mxu0 0
          %371 = vmatprep.subr.bf16.mxu0 0
          %372 = vmatpush1.bf16.msra.mxu0 0
          %373 = vmatprep.subr.bf16.mxu0 0
          %374 = vmatpush1.bf16.msra.mxu0 0
          %375 = vmatprep.subr.bf16.mxu0 0
          %376 = vmatpush1.bf16.msra.mxu0 0
          %377 = vmatprep.subr.bf16.mxu0 0
          %378 = vmatpush1.bf16.msra.mxu0 0
          %379 = vmatprep.subr.bf16.mxu0 0
          %380 = vmatpush1.bf16.msra.mxu0 0
          %381 = vmatprep.mubr.bf16.mxu0 0
          %382 = vmatmul.mubr.bf16.gmra.mrb[0].mxu0 %v344
          %v383 = vpop.f32.mrb[0].mxu0
          %v384 = vadd.f32 0.0, %v383
          %v385 = vpop.f32.mrb[0].mxu0
          %v386 = vpop.f32.mrb[0].mxu0
          %v387 = vadd.f32 0.0, %v386
          %v388 = vpop.f32.mrb[0].mxu0
          %389 = vmatprep.mubr.bf16.mxu0 0
          %390 = vmatmul.mubr.bf16.gmra.mrb[0].mxu0 %v347
          %v391 = vpop.f32.mrb[0].mxu0
          %v392 = vadd.f32 0.0, %v391
          %v393 = vpop.f32.mrb[0].mxu0
          %v394 = vpop.f32.mrb[0].mxu0
          %v395 = vadd.f32 0.0, %v394
          %v396 = vpop.f32.mrb[0].mxu0
          %397 = vdwg.mxu0
          %v398 = vpack.c.bf16 %v387, %v384
          %v399 = vpack.c.bf16 %v395, %v392
          %v400 = vld [vmem:[#allocation8] sm:$0xf]
          %v401 = vld [vmem:[#allocation8 + $0x4] sm:$0xf]
          %v402 = vld [vmem:[#allocation8 + $0x8] sm:$0xf]
          %v403 = vld [vmem:[#allocation8 + $0xc] sm:$0xf]
          %v404 = vld [vmem:[#allocation8 + $0x10] sm:$0xf]
          %v405 = vld [vmem:[#allocation8 + $0x14] sm:$0xf]
          %v406 = vld [vmem:[#allocation8 + $0x18] sm:$0xf]
          %v407 = vld [vmem:[#allocation8 + $0x1c] sm:$0xf]
          %v408 = vld [vmem:[#allocation8 + $0x20] sm:$0xf]
          %v409 = vld [vmem:[#allocation8 + $0x24] sm:$0xf]
          %v410 = vld [vmem:[#allocation8 + $0x28] sm:$0xf]
          %v411 = vld [vmem:[#allocation8 + $0x2c] sm:$0xf]
          %v412 = vld [vmem:[#allocation8 + $0x30] sm:$0xf]
          %v413 = vld [vmem:[#allocation8 + $0x34] sm:$0xf]
          %v414 = vld [vmem:[#allocation8 + $0x38] sm:$0xf]
          %v415 = vld [vmem:[#allocation8 + $0x3c] sm:$0xf]
          %v432 = vunpack.c.l.b16 %v400
          %v433 = vunpack.c.l.b16 %v401
          %v434 = vunpack.c.l.b16 %v402
          %v435 = vunpack.c.l.b16 %v403
          %v436 = vunpack.c.l.b16 %v404
          %v437 = vunpack.c.l.b16 %v405
          %v438 = vunpack.c.l.b16 %v406
          %v439 = vunpack.c.l.b16 %v407
          %v440 = vunpack.c.l.b16 %v408
          %v441 = vunpack.c.l.b16 %v409
          %v442 = vunpack.c.l.b16 %v410
          %v443 = vunpack.c.l.b16 %v411
          %v444 = vunpack.c.l.b16 %v412
          %v445 = vunpack.c.l.b16 %v413
          %v446 = vunpack.c.l.b16 %v414
          %v447 = vunpack.c.l.b16 %v415
          %v448 = vpack.c.b16 %v433, %v432
          %v449 = vpack.c.b16 %v435, %v434
          %v450 = vpack.c.b16 %v437, %v436
          %v451 = vpack.c.b16 %v439, %v438
          %v452 = vpack.c.b16 %v441, %v440
          %v453 = vpack.c.b16 %v443, %v442
          %v454 = vpack.c.b16 %v445, %v444
          %v455 = vpack.c.b16 %v447, %v446
          %464 = vmatprep.subr.bf16.mxu0 0
          %465 = vmatpush1.bf16.msra.mxu0 %v448
          %466 = vmatprep.subr.bf16.mxu0 0
          %467 = vmatpush1.bf16.msra.mxu0 %v449
          %468 = vmatprep.subr.bf16.mxu0 0
          %469 = vmatpush1.bf16.msra.mxu0 %v450
          %470 = vmatprep.subr.bf16.mxu0 0
          %471 = vmatpush1.bf16.msra.mxu0 %v451
          %472 = vmatprep.subr.bf16.mxu0 0
          %473 = vmatpush1.bf16.msra.mxu0 %v452
          %474 = vmatprep.subr.bf16.mxu0 0
          %475 = vmatpush1.bf16.msra.mxu0 %v453
          %476 = vmatprep.subr.bf16.mxu0 0
          %477 = vmatpush1.bf16.msra.mxu0 %v454
          %478 = vmatprep.subr.bf16.mxu0 0
          %479 = vmatpush1.bf16.msra.mxu0 %v455
          %480 = vmatprep.subr.bf16.mxu0 0
          %481 = vmatpush1.bf16.msra.mxu0 0
          %482 = vmatprep.subr.bf16.mxu0 0
          %483 = vmatpush1.bf16.msra.mxu0 0
          %484 = vmatprep.subr.bf16.mxu0 0
          %485 = vmatpush1.bf16.msra.mxu0 0
          %486 = vmatprep.subr.bf16.mxu0 0
          %487 = vmatpush1.bf16.msra.mxu0 0
          %488 = vmatprep.subr.bf16.mxu0 0
          %489 = vmatpush1.bf16.msra.mxu0 0
          %490 = vmatprep.subr.bf16.mxu0 0
          %491 = vmatpush1.bf16.msra.mxu0 0
          %492 = vmatprep.subr.bf16.mxu0 0
          %493 = vmatpush1.bf16.msra.mxu0 0
          %494 = vmatprep.subr.bf16.mxu0 0
          %495 = vmatpush1.bf16.msra.mxu0 0
          %496 = vmatprep.mubr.bf16.mxu0 0
          %497 = vmatmul.mubr.bf16.gmra.mrb[0].mxu0 %v398
          %v498 = vpop.f32.mrb[0].mxu0
          %v499 = vadd.f32 0.0, %v498
          %v500 = vpop.f32.mrb[0].mxu0
          %v501 = vpop.f32.mrb[0].mxu0
          %v502 = vadd.f32 0.0, %v501
          %v503 = vpop.f32.mrb[0].mxu0
          %504 = vmatprep.mubr.bf16.mxu0 0
          %505 = vmatmul.mubr.bf16.gmra.mrb[0].mxu0 %v399
          %v506 = vpop.f32.mrb[0].mxu0
          %v507 = vadd.f32 0.0, %v506
          %v508 = vpop.f32.mrb[0].mxu0
          %v509 = vpop.f32.mrb[0].mxu0
          %v510 = vadd.f32 0.0, %v509
          %v511 = vpop.f32.mrb[0].mxu0
          %512 = vdwg.mxu0
          %513 = vst [vmem:[%s214] sm:$0xff] %v499
          %514 = vst [vmem:[%s214 + $0x8] sm:$0xff] %v502
          %515 = vst [vmem:[%s214 + $0x10] sm:$0xff] %v507
          %516 = vst [vmem:[%s214 + $0x18] sm:$0xff] %v510
        $region52: #{tpu_custom_call.1} parent=31 // pred_fallthru
          _
        %s517 = sand.u32 %s109, 1
        %s518 = scalar_lea.sflag [#allocation5], %s517
        %s519 = sand.u32 %s109, 1
        %s520 = smul.addr %s519, 32
        %s521 = scalar_lea.vmem [#allocation9], %s520
        // Predicated region
        $region53: #{tpu_custom_call.1} parent=31 // pred_check
          %p522 = pneg %p119
        $region54: #{tpu_custom_call.1} parent=31 // pred_check_branch
          %524 = sbr.rel (%p522) target = $region56
        $region55: #{tpu_custom_call.1} parent=31 // pred_region
          %s525 = smul.u32 %s24, %s23
          %s526 = smul.u32 4, %s525
          %s528 = ssub.s32 512, 512
          %529 = vsyncadd %s518, %s528
          %s530 = smul.addr %s526, 128
          %s531 = scalar_lea.hbm %s3, %s530
          %s532 = sshll.u32 %s521, 4
          %s533 = int_to_ptr.vmem [resolvable:$true] %s532
          %538 = dma.vmem_to_hbm [thread:$0]  %s533, 512, %s531, %s518, 128, 128, 8
        $region56: #{tpu_custom_call.1} parent=31 // pred_fallthru
          _
      $region32: #{tpu_custom_call.1} parent=5 // pred_fallthru
        _
      %p539 = scmp.le.s32.totalorder 2, %s14
      // Predicated region
      $region57: #{tpu_custom_call.1} parent=5 // pred_check
        %p540 = pneg %p539
      $region58: #{tpu_custom_call.1} parent=5 // pred_check_branch
        %542 = sbr.rel (%p540) target = $region60
      $region59: #{tpu_custom_call.1} parent=5 // pred_region
        %s543 = ssub.s32 %s14, 2
        // Predicated region
        $region61: #{tpu_custom_call.1} parent=59 // pred_check
          %p544 = pneg %p125
        $region62: #{tpu_custom_call.1} parent=59 // pred_check_branch
          %546 = sbr.rel (%p544) target = $region64
        $region63: #{tpu_custom_call.1} parent=59 // pred_region
          %s547 = sand.u32 %s110, 1
          %s548 = scalar_lea.sflag [#allocation5], %s547
          %s549 = sand.u32 %s110, 1
          %s550 = smul.addr %s549, 32
          %s551 = scalar_lea.vmem [#allocation9], %s550
          %552 = dma.done %s548, 512
        $region64: #{tpu_custom_call.1} parent=59 // pred_fallthru
          _
      $region60: #{tpu_custom_call.1} parent=5 // pred_fallthru
        _
    $region6: #{tpu_custom_call.1} parent=1 // loop_footer
      %s18 = sadd.s32 1, %s14
    $region7: #{tpu_custom_call.1} parent=1 // loop_footer_branch
      %13 = sbr.rel target = $region3
    $region8: #{tpu_custom_call.1} parent=1 // loop_exit
      _
    %553 = vsyncpa [#allocation4], 1
    %s554 = scalar_lea.sflag [#allocation4], 1
    %555 = vsyncpa %s554, 1
    %556 = vsyncpa [#allocation7], 1
    %557 = vsyncpa [#allocation5], 1
    %s558 = scalar_lea.sflag [#allocation5], 1
    %559 = vsyncpa %s558, 1

</llo_original>
